<compile_context>
chip_gen: v6e
topology: v6e:2x2x1
jax: 0.10.0
libtpu: 0.0.40
codegen_flags: <defaults>
</compile_context>

<pallas_src>
import jax
import jax.numpy as jnp
from jax import lax
from jax.experimental import pallas as pl
from jax.experimental.pallas import tpu as pltpu


# ----------------------------- Pallas kernel --------------------------------

def _make_inception_kernel(L, nb, c1p, c20p, c30p, c4p, c21p, c31p, k2, k3):
    """Kernel factory.  All sizes are Python ints (already padded to x8)."""
    n123 = c1p + c20p + c30p
    multi_sample = nb > 1      # blocks with >1 sample need boundary masks

    def kernel(x_ref, pos_ref, wA_ref, bA_ref, w22_ref, b22_ref,
               w32_ref, b32_ref, b4_ref, out_ref):
        cd = wA_ref.dtype
        x = x_ref[...]                        # (Cin, NbL)  lanes = packed samples
        NbL = x.shape[1]
        pos = pos_ref[...]                    # (1, NbL) int32: lane pos within its sample

        # ---- fused 1x1 stage for ALL four branches (one MXU matmul) ----------
        hA = jnp.dot(wA_ref[...], x.astype(cd),
                     preferred_element_type=jnp.float32) + bA_ref[...]

        hA123 = jnp.maximum(hA[0:n123, :], 0.0)
        p1 = hA123[0:c1p, :]                          # branch 1 output
        h2 = hA123[c1p:c1p + c20p, :]                 # branch 2 hidden
        h3 = hA123[c1p + c20p:n123, :]                # branch 3 hidden
        h4 = hA[n123:n123 + c4p, :]                   # w4 @ x (bias/ReLU after pooling)

        def masked(sl, d):
            # Zero lanes whose tap at offset d crosses a sample boundary.
            if d == 0 or not multi_sample:
                return sl
            if d < 0:
                return jnp.where(pos >= -d, sl, jnp.zeros((), sl.dtype))
            return jnp.where(pos <= (L - 1) - d, sl, jnp.zeros((), sl.dtype))

        def convK(h, w_ref, b_ref, K):
            # "same" K-tap conv as ONE MXU matmul: im2col along the sublane
            # axis (K lane-shifted copies of h), contraction depth K*Cmid.
            P = K // 2
            hc = h.astype(cd)                 # cast once; build im2col in compute dtype
            C = hc.shape[0]
            zp = jnp.zeros((C, P), cd)
            hp = jnp.concatenate([zp, hc, zp], axis=1)            # (C, NbL + 2P)
            taps = [masked(hp[:, k:k + NbL], k - P) for k in range(K)]
            stacked = jnp.concatenate(taps, axis=0)               # (K*C, NbL)
            y = jnp.dot(w_ref[...], stacked, preferred_element_type=jnp.float32)
            return jnp.maximum(y + b_ref[...], 0.0)

        p2 = convK(h2, w22_ref, b22_ref, k2)                      # (c21p, NbL)
        p3 = convK(h3, w32_ref, b32_ref, k3)                      # (c31p, NbL)

        # ---- branch 4: AvgPool1d(3,1,1, count_include_pad=True) on (w4 @ x) ---
        z1 = jnp.zeros((c4p, 1), jnp.float32)
        h4p = jnp.concatenate([z1, h4, z1], axis=1)               # (c4p, NbL + 2)
        left = h4p[:, 0:NbL]
        mid = h4p[:, 1:NbL + 1]
        right = h4p[:, 2:NbL + 2]
        if multi_sample:
            left = jnp.where(pos >= 1, left, 0.0)
            right = jnp.where(pos <= L - 2, right, 0.0)
        pooled = (left + mid + right) * (1.0 / 3.0)
        p4 = jnp.maximum(pooled + b4_ref[...], 0.0)

        # ---- store each branch at its 8-aligned sublane offset ----------------
        od = out_ref.dtype
        out_ref[0:c1p, :] = p1.astype(od)
        out_ref[c1p:c1p + c21p, :] = p2.astype(od)
        out_ref[c1p + c21p:c1p + c21p + c31p, :] = p3.astype(od)
        out_ref[c1p + c21p + c31p:c1p + c21p + c31p + c4p, :] = p4.astype(od)

    return kernel


# ------------------------------ wrapper --------------------------------------

def _round_up(x, m):
    return ((x + m - 1) // m) * m


def _pick_samples_per_block(N, L):
    """Samples per grid step.  Prefer lane-dense (multiple-of-128) blocks and
    >=2 grid steps (v7x has 2 TensorCores); fall back to the whole batch
    (block == full array is always a legal BlockSpec)."""
    cands = [nb for nb in range(1, N + 1)
             if N % nb == 0 and (nb * L) % 128 == 0 and nb * L <= 4096]
    if cands:
        multi = [nb for nb in cands if N // nb >= 2]
        return max(multi) if multi else max(cands)
    return N


def inception_forward(x_ncl, params, compute_dtype=jnp.float32):
    """x_ncl: (N, Cin, L) float32 (PyTorch Conv1d layout). Returns (N, Cout, L).

    compute_dtype: dtype of the MXU matmul operands (accumulation is always
    f32).  bfloat16 is the MXU fast path on v5e/v6e/v7x; all elementwise work
    (bias, ReLU, pooling) stays f32 regardless.
    """
    N, Cin, L = x_ncl.shape
    cd = compute_dtype

    w1, b1 = params['p1_1']
    w21, b21 = params['p2_1']
    w22, b22 = params['p2_2']
    w31, b31 = params['p3_1']
    w32, b32 = params['p3_2']
    w4, b4 = params['p4_2']

    c1, c2_0, c3_0, c4 = w1.shape[0], w21.shape[0], w31.shape[0], w4.shape[0]
    c2_1, k2 = w22.shape[0], w22.shape[2]
    c3_1, k3 = w32.shape[0], w32.shape[2]
    Cout = c1 + c2_1 + c3_1 + c4

    # ---- pad every channel segment to a multiple of 8 (sublane alignment) ----
    c1p, c20p, c30p, c4p = (_round_up(c, 8) for c in (c1, c2_0, c3_0, c4))
    c21p, c31p = _round_up(c2_1, 8), _round_up(c3_1, 8)
    Arows = c1p + c20p + c30p + c4p
    Cout_p = c1p + c21p + c31p + c4p

    def pad_rows(a, rows):
        return jnp.pad(a, ((0, rows - a.shape[0]),) + ((0, 0),) * (a.ndim - 1))

    # Fused 1x1 weight: branches 1/2/3 plus branch 4 (pool and 1x1 channel mix
    # commute, so the branch-4 1x1 reads x directly; its bias is added after
    # pooling, hence a zero bias row here).
    wA = jnp.concatenate([pad_rows(w1[:, :, 0], c1p),
                          pad_rows(w21[:, :, 0], c20p),
                          pad_rows(w31[:, :, 0], c30p),
                          pad_rows(w4[:, :, 0], c4p)], axis=0).astype(cd)
    bA = jnp.concatenate([pad_rows(b1.reshape(-1, 1), c1p),
                          pad_rows(b21.reshape(-1, 1), c20p),
                          pad_rows(b31.reshape(-1, 1), c30p),
                          jnp.zeros((c4p, 1), jnp.float32)],
                         axis=0).astype(jnp.float32)

    def prep_k(w, b, cinp, coutp):
        # (Cout, Cmid, K) -> zero-pad channels -> (Coutp, K*Cmidp); column index
        # = k*Cmidp + cin, matching the kernel's im2col row order.
        co, cm, K = w.shape
        wp = jnp.zeros((coutp, cinp, K), w.dtype).at[:co, :cm, :].set(w)
        wk = jnp.transpose(wp, (0, 2, 1)).reshape(coutp, K * cinp).astype(cd)
        return wk, pad_rows(b.reshape(-1, 1), coutp).astype(jnp.float32)

    w22k, b22k = prep_k(w22, b22, c20p, c21p)
    w32k, b32k = prep_k(w32, b32, c30p, c31p)
    b4k = pad_rows(b4.reshape(-1, 1), c4p).astype(jnp.float32)

    # ---- lane-dense layout: (Cin, N*L), samples packed along the lane axis ----
    x_flat = jnp.transpose(x_ncl, (1, 0, 2)).reshape(Cin, N * L)
    pos = jnp.tile(jnp.arange(L, dtype=jnp.int32), N).reshape(1, N * L)

    nb = _pick_samples_per_block(N, L)
    blk = nb * L
    grid = (N // nb,)

    weight_args = [wA, bA, w22k, b22k, w32k, b32k, b4k]

    def const_spec(a):
        # Constant index map -> fetched once across the grid.  (pl.Buffered(1)
        # would also single-buffer these tiny weights; not needed here.)
        nd = a.ndim
        return pl.BlockSpec(a.shape, lambda i, _nd=nd: (0,) * _nd)

    kernel = _make_inception_kernel(L, nb, c1p, c20p, c30p, c4p, c21p, c31p, k2, k3)

    # ---- scheduling / memory hints --------------------------------------------
    itemsize = jnp.dtype(cd).itemsize
    NL = N * L
    flops = 2 * NL * (Arows * Cin + c21p * k2 * c20p + c31p * k3 * c30p)
    weight_bytes = sum(int(a.size) * a.dtype.itemsize for a in weight_args)
    bytes_accessed = 4 * (Cin * NL + Cout_p * NL + NL) + weight_bytes
    cost = pl.CostEstimate(flops=flops, transcendentals=0,
                           bytes_accessed=bytes_accessed)

    vmem_est = (2 * 4 * (Cin * blk + blk + Cout_p * blk)           # double-buffered I/O
                + 2 * weight_bytes
                + 4 * blk * (Arows + c1p + c21p + c31p + c4p)       # hA + branch outputs (f32)
                + 2 * itemsize * blk * (k2 * c20p + k3 * c30p))     # im2col stacks + taps
    vmem_limit = int(min(max(3 * vmem_est, 32 * 2 ** 20), 64 * 2 ** 20))

    out_flat = pl.pallas_call(
        kernel,
        out_shape=jax.ShapeDtypeStruct((Cout_p, N * L), x_ncl.dtype),
        grid=grid,
        in_specs=[pl.BlockSpec((Cin, blk), lambda i: (0, i)),
                  pl.BlockSpec((1, blk), lambda i: (0, i))]
                 + [const_spec(a) for a in weight_args],
        out_specs=pl.BlockSpec((Cout_p, blk), lambda i: (0, i)),
        compiler_params=pltpu.CompilerParams(
            dimension_semantics=("parallel",),
            vmem_limit_bytes=vmem_limit),
        cost_estimate=cost,
    )(x_flat, pos, *weight_args)

    # Strip channel padding and restore (N, Cout, L).
    offs = [0, c1p, c1p + c21p, c1p + c21p + c31p]
    widths = [c1, c2_1, c3_1, c4]
    if Cout_p == Cout:
        out_c = out_flat
    else:
        out_c = jnp.concatenate([out_flat[o:o + w] for o, w in zip(offs, widths)],
                                axis=0)
    return out_c.reshape(Cout, N, L).transpose(1, 0, 2)


# --------------------------- pure-JAX reference -------------------------------

def _conv1d_ref(x, w, b, padding):
    out = lax.conv_general_dilated(
        x, w, window_strides=(1,), padding=[(padding, padding)],
        dimension_numbers=('NCH', 'OIH', 'NCH'))
    return out + b[None, :, None]


def inception_ref(x, params):
    relu = jax.nn.relu
    w1, b1 = params['p1_1']
    w21, b21 = params['p2_1']
    w22, b22 = params['p2_2']
    w31, b31 = params['p3_1']
    w32, b32 = params['p3_2']
    w4, b4 = params['p4_2']
    p1 = relu(_conv1d_ref(x, w1, b1, 0))
    p2 = relu(_conv1d_ref(relu(_conv1d_ref(x, w21, b21, 0)), w22, b22, 2))
    p3 = relu(_conv1d_ref(relu(_conv1d_ref(x, w31, b31, 0)), w32, b32, 11))
    xp = jnp.pad(x, ((0, 0), (0, 0), (1, 1)))
    pooled = (xp[:, :, 0:-2] + xp[:, :, 1:-1] + xp[:, :, 2:]) / 3.0  # count_include_pad=True
    p4 = relu(_conv1d_ref(pooled, w4, b4, 0))
    return jnp.concatenate([p1, p2, p3, p4], axis=1)


# ------------------------------ param init ------------------------------------

def init_params(key, in_channels, c1, c2, c3, c4):
    def conv_params(k, cout, cin, ksize):
        kw, kb = jax.random.split(k)
        bound = 1.0 / (cin * ksize) ** 0.5
        w = jax.random.uniform(kw, (cout, cin, ksize), jnp.float32, -bound, bound)
        b = jax.random.uniform(kb, (cout,), jnp.float32, -bound, bound)
        return w, b

    keys = jax.random.split(key, 6)
    return {
        'p1_1': conv_params(keys[0], c1, in_channels, 1),
        'p2_1': conv_params(keys[1], c2[0], in_channels, 1),
        'p2_2': conv_params(keys[2], c2[1], c2[0], 5),
        'p3_1': conv_params(keys[3], c3[0], in_channels, 1),
        'p3_2': conv_params(keys[4], c3[1], c3[0], 23),
        'p4_2': conv_params(keys[5], c4, in_channels, 1),
    }


if __name__ == "__main__":
    key = jax.random.PRNGKey(0)
    kx, kp = jax.random.split(key)

    N, Cin, L = 2, 4, 16
    c1, c2, c3, c4 = 4, (4, 8), (4, 8), 4

    x = jax.random.normal(kx, (N, Cin, L), dtype=jnp.float32)
    params = init_params(kp, Cin, c1, c2, c3, c4)

    ref = inception_ref(x, params)

    # f32 MXU operands (bit-faithful apart from linear-op reassociation).
    out = jax.block_until_ready(inception_forward(x, params))
    assert out.shape == (N, c1 + c2[1] + c3[1] + c4, L), out.shape
    err = float(jnp.max(jnp.abs(out - ref)))
    assert jnp.allclose(out, ref, atol=2e-4, rtol=2e-4), f"max abs err {err}"

    # bf16 MXU operands (v5e/v6e/v7x fast path), f32 accumulate -> looser tol.
    out_bf16 = jax.block_until_ready(
        inception_forward(x, params, compute_dtype=jnp.bfloat16))
    err_bf16 = float(jnp.max(jnp.abs(out_bf16 - ref)))
    assert jnp.allclose(out_bf16, ref, atol=7.5e-2, rtol=7.5e-2), \
        f"bf16 max abs err {err_bf16}"

    print("KERNEL_OK")
</pallas_src>

<mosaic_0001>
module attributes {stable_mosaic.version = 11 : i64} {
  func.func @kernel(%arg0: i32, %arg1: memref<4x32xf32, #tpu.memory_space<vmem>>, %arg2: memref<1x32xi32, #tpu.memory_space<vmem>>, %arg3: memref<32x4xf32, #tpu.memory_space<vmem>>, %arg4: memref<32x1xf32, #tpu.memory_space<vmem>>, %arg5: memref<8x40xf32, #tpu.memory_space<vmem>>, %arg6: memref<8x1xf32, #tpu.memory_space<vmem>>, %arg7: memref<8x184xf32, #tpu.memory_space<vmem>>, %arg8: memref<8x1xf32, #tpu.memory_space<vmem>>, %arg9: memref<8x1xf32, #tpu.memory_space<vmem>>, %arg10: memref<32x32xf32, #tpu.memory_space<vmem>>) attributes {dimension_semantics = [#tpu.dimension_semantics<parallel>], iteration_bounds = array<i64: 1>, scalar_prefetch = 0 : i64, scratch_operands = 0 : i64, tpu.core_type = #tpu.core_type<tc>, window_params = [{transform_indices = @transform_0, window_bounds = array<i64: 4, 32>}, {transform_indices = @transform_1, window_bounds = array<i64: 1, 32>}, {pipeline_mode = #tpu.pipeline_mode<synchronous>, transform_indices = @transform_2, window_bounds = array<i64: 32, 4>}, {pipeline_mode = #tpu.pipeline_mode<synchronous>, transform_indices = @transform_3, window_bounds = array<i64: 32, 1>}, {pipeline_mode = #tpu.pipeline_mode<synchronous>, transform_indices = @transform_4, window_bounds = array<i64: 8, 40>}, {pipeline_mode = #tpu.pipeline_mode<synchronous>, transform_indices = @transform_5, window_bounds = array<i64: 8, 1>}, {pipeline_mode = #tpu.pipeline_mode<synchronous>, transform_indices = @transform_6, window_bounds = array<i64: 8, 184>}, {pipeline_mode = #tpu.pipeline_mode<synchronous>, transform_indices = @transform_7, window_bounds = array<i64: 8, 1>}, {pipeline_mode = #tpu.pipeline_mode<synchronous>, transform_indices = @transform_8, window_bounds = array<i64: 8, 1>}, {transform_indices = @transform_9, window_bounds = array<i64: 32, 32>}]} {
    %c0 = arith.constant 0 : index
    %c0_0 = arith.constant 0 : index
    %0 = vector.load %arg1[%c0, %c0_0] : memref<4x32xf32, #tpu.memory_space<vmem>>, vector<4x32xf32>
    %c0_1 = arith.constant 0 : index
    %c0_2 = arith.constant 0 : index
    %1 = vector.load %arg2[%c0_1, %c0_2] : memref<1x32xi32, #tpu.memory_space<vmem>>, vector<1x32xi32>
    %c0_3 = arith.constant 0 : index
    %c0_4 = arith.constant 0 : index
    %2 = vector.load %arg3[%c0_3, %c0_4] : memref<32x4xf32, #tpu.memory_space<vmem>>, vector<32x4xf32>
    %cst = arith.constant dense<0.000000e+00> : vector<32x32xf32>
    %3 = tpu.matmul %2, %0, %cst {dimension_numbers = #tpu.dot_dimension_numbers<[1], [0], [0], [1], [0, 0, 1, 1], [], []>} : vector<32x4xf32>, vector<4x32xf32>, vector<32x32xf32> -> vector<32x32xf32>
    %c0_5 = arith.constant 0 : index
    %c0_6 = arith.constant 0 : index
    %4 = vector.load %arg4[%c0_5, %c0_6] : memref<32x1xf32, #tpu.memory_space<vmem>>, vector<32x1xf32>
    %5 = vector.broadcast %4 : vector<32x1xf32> to vector<32x32xf32>
    %6 = arith.addf %3, %5 : vector<32x32xf32>
    %7 = vector.extract_strided_slice %6 {offsets = [0, 0], sizes = [24, 32], strides = [1, 1]} : vector<32x32xf32> to vector<24x32xf32>
    %cst_7 = arith.constant 0.000000e+00 : f32
    %8 = vector.broadcast %cst_7 : f32 to vector<24x32xf32>
    %9 = arith.maximumf %7, %8 : vector<24x32xf32>
    %10 = vector.extract_strided_slice %9 {offsets = [0, 0], sizes = [8, 32], strides = [1, 1]} : vector<24x32xf32> to vector<8x32xf32>
    %11 = vector.extract_strided_slice %9 {offsets = [8, 0], sizes = [8, 32], strides = [1, 1]} : vector<24x32xf32> to vector<8x32xf32>
    %12 = vector.extract_strided_slice %9 {offsets = [16, 0], sizes = [8, 32], strides = [1, 1]} : vector<24x32xf32> to vector<8x32xf32>
    %13 = vector.extract_strided_slice %6 {offsets = [24, 0], sizes = [8, 32], strides = [1, 1]} : vector<32x32xf32> to vector<8x32xf32>
    %cst_8 = arith.constant 0.000000e+00 : f32
    %14 = vector.broadcast %cst_8 : f32 to vector<8x2xf32>
    %15 = tpu.concatenate %14, %11, %14 in 1 : vector<8x2xf32>, vector<8x32xf32>, vector<8x2xf32> -> vector<8x36xf32>
    %16 = vector.extract_strided_slice %15 {offsets = [0, 0], sizes = [8, 32], strides = [1, 1]} : vector<8x36xf32> to vector<8x32xf32>
    %c2_i32 = arith.constant 2 : i32
    %17 = vector.broadcast %c2_i32 : i32 to vector<1x32xi32>
    %18 = arith.cmpi sge, %1, %17 : vector<1x32xi32>
    %cst_9 = arith.constant 0.000000e+00 : f32
    %19 = vector.shape_cast %18 : vector<1x32xi1> to vector<1x32xi1>
    %20 = vector.broadcast %19 : vector<1x32xi1> to vector<8x32xi1>
    %21 = vector.broadcast %cst_9 : f32 to vector<8x32xf32>
    %22 = arith.select %20, %16, %21 : vector<8x32xi1>, vector<8x32xf32>
    %23 = vector.extract_strided_slice %15 {offsets = [0, 1], sizes = [8, 32], strides = [1, 1]} : vector<8x36xf32> to vector<8x32xf32>
    %c1_i32 = arith.constant 1 : i32
    %24 = vector.broadcast %c1_i32 : i32 to vector<1x32xi32>
    %25 = arith.cmpi sge, %1, %24 : vector<1x32xi32>
    %cst_10 = arith.constant 0.000000e+00 : f32
    %26 = vector.shape_cast %25 : vector<1x32xi1> to vector<1x32xi1>
    %27 = vector.broadcast %26 : vector<1x32xi1> to vector<8x32xi1>
    %28 = vector.broadcast %cst_10 : f32 to vector<8x32xf32>
    %29 = arith.select %27, %23, %28 : vector<8x32xi1>, vector<8x32xf32>
    %30 = vector.extract_strided_slice %15 {offsets = [0, 2], sizes = [8, 32], strides = [1, 1]} : vector<8x36xf32> to vector<8x32xf32>
    %31 = vector.extract_strided_slice %15 {offsets = [0, 3], sizes = [8, 32], strides = [1, 1]} : vector<8x36xf32> to vector<8x32xf32>
    %c14_i32 = arith.constant 14 : i32
    %32 = vector.broadcast %c14_i32 : i32 to vector<1x32xi32>
    %33 = arith.cmpi sle, %1, %32 : vector<1x32xi32>
    %cst_11 = arith.constant 0.000000e+00 : f32
    %34 = vector.shape_cast %33 : vector<1x32xi1> to vector<1x32xi1>
    %35 = vector.broadcast %34 : vector<1x32xi1> to vector<8x32xi1>
    %36 = vector.broadcast %cst_11 : f32 to vector<8x32xf32>
    %37 = arith.select %35, %31, %36 : vector<8x32xi1>, vector<8x32xf32>
    %38 = vector.extract_strided_slice %15 {offsets = [0, 4], sizes = [8, 32], strides = [1, 1]} : vector<8x36xf32> to vector<8x32xf32>
    %c13_i32 = arith.constant 13 : i32
    %39 = vector.broadcast %c13_i32 : i32 to vector<1x32xi32>
    %40 = arith.cmpi sle, %1, %39 : vector<1x32xi32>
    %cst_12 = arith.constant 0.000000e+00 : f32
    %41 = vector.shape_cast %40 : vector<1x32xi1> to vector<1x32xi1>
    %42 = vector.broadcast %41 : vector<1x32xi1> to vector<8x32xi1>
    %43 = vector.broadcast %cst_12 : f32 to vector<8x32xf32>
    %44 = arith.select %42, %38, %43 : vector<8x32xi1>, vector<8x32xf32>
    %45 = tpu.concatenate %22, %29, %30, %37, %44 in 0 : vector<8x32xf32>, vector<8x32xf32>, vector<8x32xf32>, vector<8x32xf32>, vector<8x32xf32> -> vector<40x32xf32>
    %c0_13 = arith.constant 0 : index
    %c0_14 = arith.constant 0 : index
    %46 = vector.load %arg5[%c0_13, %c0_14] : memref<8x40xf32, #tpu.memory_space<vmem>>, vector<8x40xf32>
    %cst_15 = arith.constant dense<0.000000e+00> : vector<8x32xf32>
    %47 = tpu.matmul %46, %45, %cst_15 {dimension_numbers = #tpu.dot_dimension_numbers<[1], [0], [0], [1], [0, 0, 1, 1], [], []>} : vector<8x40xf32>, vector<40x32xf32>, vector<8x32xf32> -> vector<8x32xf32>
    %c0_16 = arith.constant 0 : index
    %c0_17 = arith.constant 0 : index
    %48 = vector.load %arg6[%c0_16, %c0_17] : memref<8x1xf32, #tpu.memory_space<vmem>>, vector<8x1xf32>
    %49 = vector.broadcast %48 : vector<8x1xf32> to vector<8x32xf32>
    %50 = arith.addf %47, %49 : vector<8x32xf32>
    %cst_18 = arith.constant 0.000000e+00 : f32
    %51 = vector.broadcast %cst_18 : f32 to vector<8x32xf32>
    %52 = arith.maximumf %50, %51 : vector<8x32xf32>
    %cst_19 = arith.constant 0.000000e+00 : f32
    %53 = vector.broadcast %cst_19 : f32 to vector<8x11xf32>
    %54 = tpu.concatenate %53, %12, %53 in 1 : vector<8x11xf32>, vector<8x32xf32>, vector<8x11xf32> -> vector<8x54xf32>
    %55 = vector.extract_strided_slice %54 {offsets = [0, 0], sizes = [8, 32], strides = [1, 1]} : vector<8x54xf32> to vector<8x32xf32>
    %c11_i32 = arith.constant 11 : i32
    %56 = vector.broadcast %c11_i32 : i32 to vector<1x32xi32>
    %57 = arith.cmpi sge, %1, %56 : vector<1x32xi32>
    %cst_20 = arith.constant 0.000000e+00 : f32
    %58 = vector.shape_cast %57 : vector<1x32xi1> to vector<1x32xi1>
    %59 = vector.broadcast %58 : vector<1x32xi1> to vector<8x32xi1>
    %60 = vector.broadcast %cst_20 : f32 to vector<8x32xf32>
    %61 = arith.select %59, %55, %60 : vector<8x32xi1>, vector<8x32xf32>
    %62 = vector.extract_strided_slice %54 {offsets = [0, 1], sizes = [8, 32], strides = [1, 1]} : vector<8x54xf32> to vector<8x32xf32>
    %c10_i32 = arith.constant 10 : i32
    %63 = vector.broadcast %c10_i32 : i32 to vector<1x32xi32>
    %64 = arith.cmpi sge, %1, %63 : vector<1x32xi32>
    %cst_21 = arith.constant 0.000000e+00 : f32
    %65 = vector.shape_cast %64 : vector<1x32xi1> to vector<1x32xi1>
    %66 = vector.broadcast %65 : vector<1x32xi1> to vector<8x32xi1>
    %67 = vector.broadcast %cst_21 : f32 to vector<8x32xf32>
    %68 = arith.select %66, %62, %67 : vector<8x32xi1>, vector<8x32xf32>
    %69 = vector.extract_strided_slice %54 {offsets = [0, 2], sizes = [8, 32], strides = [1, 1]} : vector<8x54xf32> to vector<8x32xf32>
    %c9_i32 = arith.constant 9 : i32
    %70 = vector.broadcast %c9_i32 : i32 to vector<1x32xi32>
    %71 = arith.cmpi sge, %1, %70 : vector<1x32xi32>
    %cst_22 = arith.constant 0.000000e+00 : f32
    %72 = vector.shape_cast %71 : vector<1x32xi1> to vector<1x32xi1>
    %73 = vector.broadcast %72 : vector<1x32xi1> to vector<8x32xi1>
    %74 = vector.broadcast %cst_22 : f32 to vector<8x32xf32>
    %75 = arith.select %73, %69, %74 : vector<8x32xi1>, vector<8x32xf32>
    %76 = vector.extract_strided_slice %54 {offsets = [0, 3], sizes = [8, 32], strides = [1, 1]} : vector<8x54xf32> to vector<8x32xf32>
    %c8_i32 = arith.constant 8 : i32
    %77 = vector.broadcast %c8_i32 : i32 to vector<1x32xi32>
    %78 = arith.cmpi sge, %1, %77 : vector<1x32xi32>
    %cst_23 = arith.constant 0.000000e+00 : f32
    %79 = vector.shape_cast %78 : vector<1x32xi1> to vector<1x32xi1>
    %80 = vector.broadcast %79 : vector<1x32xi1> to vector<8x32xi1>
    %81 = vector.broadcast %cst_23 : f32 to vector<8x32xf32>
    %82 = arith.select %80, %76, %81 : vector<8x32xi1>, vector<8x32xf32>
    %83 = vector.extract_strided_slice %54 {offsets = [0, 4], sizes = [8, 32], strides = [1, 1]} : vector<8x54xf32> to vector<8x32xf32>
    %c7_i32 = arith.constant 7 : i32
    %84 = vector.broadcast %c7_i32 : i32 to vector<1x32xi32>
    %85 = arith.cmpi sge, %1, %84 : vector<1x32xi32>
    %cst_24 = arith.constant 0.000000e+00 : f32
    %86 = vector.shape_cast %85 : vector<1x32xi1> to vector<1x32xi1>
    %87 = vector.broadcast %86 : vector<1x32xi1> to vector<8x32xi1>
    %88 = vector.broadcast %cst_24 : f32 to vector<8x32xf32>
    %89 = arith.select %87, %83, %88 : vector<8x32xi1>, vector<8x32xf32>
    %90 = vector.extract_strided_slice %54 {offsets = [0, 5], sizes = [8, 32], strides = [1, 1]} : vector<8x54xf32> to vector<8x32xf32>
    %c6_i32 = arith.constant 6 : i32
    %91 = vector.broadcast %c6_i32 : i32 to vector<1x32xi32>
    %92 = arith.cmpi sge, %1, %91 : vector<1x32xi32>
    %cst_25 = arith.constant 0.000000e+00 : f32
    %93 = vector.shape_cast %92 : vector<1x32xi1> to vector<1x32xi1>
    %94 = vector.broadcast %93 : vector<1x32xi1> to vector<8x32xi1>
    %95 = vector.broadcast %cst_25 : f32 to vector<8x32xf32>
    %96 = arith.select %94, %90, %95 : vector<8x32xi1>, vector<8x32xf32>
    %97 = vector.extract_strided_slice %54 {offsets = [0, 6], sizes = [8, 32], strides = [1, 1]} : vector<8x54xf32> to vector<8x32xf32>
    %c5_i32 = arith.constant 5 : i32
    %98 = vector.broadcast %c5_i32 : i32 to vector<1x32xi32>
    %99 = arith.cmpi sge, %1, %98 : vector<1x32xi32>
    %cst_26 = arith.constant 0.000000e+00 : f32
    %100 = vector.shape_cast %99 : vector<1x32xi1> to vector<1x32xi1>
    %101 = vector.broadcast %100 : vector<1x32xi1> to vector<8x32xi1>
    %102 = vector.broadcast %cst_26 : f32 to vector<8x32xf32>
    %103 = arith.select %101, %97, %102 : vector<8x32xi1>, vector<8x32xf32>
    %104 = vector.extract_strided_slice %54 {offsets = [0, 7], sizes = [8, 32], strides = [1, 1]} : vector<8x54xf32> to vector<8x32xf32>
    %c4_i32 = arith.constant 4 : i32
    %105 = vector.broadcast %c4_i32 : i32 to vector<1x32xi32>
    %106 = arith.cmpi sge, %1, %105 : vector<1x32xi32>
    %cst_27 = arith.constant 0.000000e+00 : f32
    %107 = vector.shape_cast %106 : vector<1x32xi1> to vector<1x32xi1>
    %108 = vector.broadcast %107 : vector<1x32xi1> to vector<8x32xi1>
    %109 = vector.broadcast %cst_27 : f32 to vector<8x32xf32>
    %110 = arith.select %108, %104, %109 : vector<8x32xi1>, vector<8x32xf32>
    %111 = vector.extract_strided_slice %54 {offsets = [0, 8], sizes = [8, 32], strides = [1, 1]} : vector<8x54xf32> to vector<8x32xf32>
    %c3_i32 = arith.constant 3 : i32
    %112 = vector.broadcast %c3_i32 : i32 to vector<1x32xi32>
    %113 = arith.cmpi sge, %1, %112 : vector<1x32xi32>
    %cst_28 = arith.constant 0.000000e+00 : f32
    %114 = vector.shape_cast %113 : vector<1x32xi1> to vector<1x32xi1>
    %115 = vector.broadcast %114 : vector<1x32xi1> to vector<8x32xi1>
    %116 = vector.broadcast %cst_28 : f32 to vector<8x32xf32>
    %117 = arith.select %115, %111, %116 : vector<8x32xi1>, vector<8x32xf32>
    %118 = vector.extract_strided_slice %54 {offsets = [0, 9], sizes = [8, 32], strides = [1, 1]} : vector<8x54xf32> to vector<8x32xf32>
    %c2_i32_29 = arith.constant 2 : i32
    %119 = vector.broadcast %c2_i32_29 : i32 to vector<1x32xi32>
    %120 = arith.cmpi sge, %1, %119 : vector<1x32xi32>
    %cst_30 = arith.constant 0.000000e+00 : f32
    %121 = vector.shape_cast %120 : vector<1x32xi1> to vector<1x32xi1>
    %122 = vector.broadcast %121 : vector<1x32xi1> to vector<8x32xi1>
    %123 = vector.broadcast %cst_30 : f32 to vector<8x32xf32>
    %124 = arith.select %122, %118, %123 : vector<8x32xi1>, vector<8x32xf32>
    %125 = vector.extract_strided_slice %54 {offsets = [0, 10], sizes = [8, 32], strides = [1, 1]} : vector<8x54xf32> to vector<8x32xf32>
    %c1_i32_31 = arith.constant 1 : i32
    %126 = vector.broadcast %c1_i32_31 : i32 to vector<1x32xi32>
    %127 = arith.cmpi sge, %1, %126 : vector<1x32xi32>
    %cst_32 = arith.constant 0.000000e+00 : f32
    %128 = vector.shape_cast %127 : vector<1x32xi1> to vector<1x32xi1>
    %129 = vector.broadcast %128 : vector<1x32xi1> to vector<8x32xi1>
    %130 = vector.broadcast %cst_32 : f32 to vector<8x32xf32>
    %131 = arith.select %129, %125, %130 : vector<8x32xi1>, vector<8x32xf32>
    %132 = vector.extract_strided_slice %54 {offsets = [0, 11], sizes = [8, 32], strides = [1, 1]} : vector<8x54xf32> to vector<8x32xf32>
    %133 = vector.extract_strided_slice %54 {offsets = [0, 12], sizes = [8, 32], strides = [1, 1]} : vector<8x54xf32> to vector<8x32xf32>
    %c14_i32_33 = arith.constant 14 : i32
    %134 = vector.broadcast %c14_i32_33 : i32 to vector<1x32xi32>
    %135 = arith.cmpi sle, %1, %134 : vector<1x32xi32>
    %cst_34 = arith.constant 0.000000e+00 : f32
    %136 = vector.shape_cast %135 : vector<1x32xi1> to vector<1x32xi1>
    %137 = vector.broadcast %136 : vector<1x32xi1> to vector<8x32xi1>
    %138 = vector.broadcast %cst_34 : f32 to vector<8x32xf32>
    %139 = arith.select %137, %133, %138 : vector<8x32xi1>, vector<8x32xf32>
    %140 = vector.extract_strided_slice %54 {offsets = [0, 13], sizes = [8, 32], strides = [1, 1]} : vector<8x54xf32> to vector<8x32xf32>
    %c13_i32_35 = arith.constant 13 : i32
    %141 = vector.broadcast %c13_i32_35 : i32 to vector<1x32xi32>
    %142 = arith.cmpi sle, %1, %141 : vector<1x32xi32>
    %cst_36 = arith.constant 0.000000e+00 : f32
    %143 = vector.shape_cast %142 : vector<1x32xi1> to vector<1x32xi1>
    %144 = vector.broadcast %143 : vector<1x32xi1> to vector<8x32xi1>
    %145 = vector.broadcast %cst_36 : f32 to vector<8x32xf32>
    %146 = arith.select %144, %140, %145 : vector<8x32xi1>, vector<8x32xf32>
    %147 = vector.extract_strided_slice %54 {offsets = [0, 14], sizes = [8, 32], strides = [1, 1]} : vector<8x54xf32> to vector<8x32xf32>
    %c12_i32 = arith.constant 12 : i32
    %148 = vector.broadcast %c12_i32 : i32 to vector<1x32xi32>
    %149 = arith.cmpi sle, %1, %148 : vector<1x32xi32>
    %cst_37 = arith.constant 0.000000e+00 : f32
    %150 = vector.shape_cast %149 : vector<1x32xi1> to vector<1x32xi1>
    %151 = vector.broadcast %150 : vector<1x32xi1> to vector<8x32xi1>
    %152 = vector.broadcast %cst_37 : f32 to vector<8x32xf32>
    %153 = arith.select %151, %147, %152 : vector<8x32xi1>, vector<8x32xf32>
    %154 = vector.extract_strided_slice %54 {offsets = [0, 15], sizes = [8, 32], strides = [1, 1]} : vector<8x54xf32> to vector<8x32xf32>
    %c11_i32_38 = arith.constant 11 : i32
    %155 = vector.broadcast %c11_i32_38 : i32 to vector<1x32xi32>
    %156 = arith.cmpi sle, %1, %155 : vector<1x32xi32>
    %cst_39 = arith.constant 0.000000e+00 : f32
    %157 = vector.shape_cast %156 : vector<1x32xi1> to vector<1x32xi1>
    %158 = vector.broadcast %157 : vector<1x32xi1> to vector<8x32xi1>
    %159 = vector.broadcast %cst_39 : f32 to vector<8x32xf32>
    %160 = arith.select %158, %154, %159 : vector<8x32xi1>, vector<8x32xf32>
    %161 = vector.extract_strided_slice %54 {offsets = [0, 16], sizes = [8, 32], strides = [1, 1]} : vector<8x54xf32> to vector<8x32xf32>
    %c10_i32_40 = arith.constant 10 : i32
    %162 = vector.broadcast %c10_i32_40 : i32 to vector<1x32xi32>
    %163 = arith.cmpi sle, %1, %162 : vector<1x32xi32>
    %cst_41 = arith.constant 0.000000e+00 : f32
    %164 = vector.shape_cast %163 : vector<1x32xi1> to vector<1x32xi1>
    %165 = vector.broadcast %164 : vector<1x32xi1> to vector<8x32xi1>
    %166 = vector.broadcast %cst_41 : f32 to vector<8x32xf32>
    %167 = arith.select %165, %161, %166 : vector<8x32xi1>, vector<8x32xf32>
    %168 = vector.extract_strided_slice %54 {offsets = [0, 17], sizes = [8, 32], strides = [1, 1]} : vector<8x54xf32> to vector<8x32xf32>
    %c9_i32_42 = arith.constant 9 : i32
    %169 = vector.broadcast %c9_i32_42 : i32 to vector<1x32xi32>
    %170 = arith.cmpi sle, %1, %169 : vector<1x32xi32>
    %cst_43 = arith.constant 0.000000e+00 : f32
    %171 = vector.shape_cast %170 : vector<1x32xi1> to vector<1x32xi1>
    %172 = vector.broadcast %171 : vector<1x32xi1> to vector<8x32xi1>
    %173 = vector.broadcast %cst_43 : f32 to vector<8x32xf32>
    %174 = arith.select %172, %168, %173 : vector<8x32xi1>, vector<8x32xf32>
    %175 = vector.extract_strided_slice %54 {offsets = [0, 18], sizes = [8, 32], strides = [1, 1]} : vector<8x54xf32> to vector<8x32xf32>
    %c8_i32_44 = arith.constant 8 : i32
    %176 = vector.broadcast %c8_i32_44 : i32 to vector<1x32xi32>
    %177 = arith.cmpi sle, %1, %176 : vector<1x32xi32>
    %cst_45 = arith.constant 0.000000e+00 : f32
    %178 = vector.shape_cast %177 : vector<1x32xi1> to vector<1x32xi1>
    %179 = vector.broadcast %178 : vector<1x32xi1> to vector<8x32xi1>
    %180 = vector.broadcast %cst_45 : f32 to vector<8x32xf32>
    %181 = arith.select %179, %175, %180 : vector<8x32xi1>, vector<8x32xf32>
    %182 = vector.extract_strided_slice %54 {offsets = [0, 19], sizes = [8, 32], strides = [1, 1]} : vector<8x54xf32> to vector<8x32xf32>
    %c7_i32_46 = arith.constant 7 : i32
    %183 = vector.broadcast %c7_i32_46 : i32 to vector<1x32xi32>
    %184 = arith.cmpi sle, %1, %183 : vector<1x32xi32>
    %cst_47 = arith.constant 0.000000e+00 : f32
    %185 = vector.shape_cast %184 : vector<1x32xi1> to vector<1x32xi1>
    %186 = vector.broadcast %185 : vector<1x32xi1> to vector<8x32xi1>
    %187 = vector.broadcast %cst_47 : f32 to vector<8x32xf32>
    %188 = arith.select %186, %182, %187 : vector<8x32xi1>, vector<8x32xf32>
    %189 = vector.extract_strided_slice %54 {offsets = [0, 20], sizes = [8, 32], strides = [1, 1]} : vector<8x54xf32> to vector<8x32xf32>
    %c6_i32_48 = arith.constant 6 : i32
    %190 = vector.broadcast %c6_i32_48 : i32 to vector<1x32xi32>
    %191 = arith.cmpi sle, %1, %190 : vector<1x32xi32>
    %cst_49 = arith.constant 0.000000e+00 : f32
    %192 = vector.shape_cast %191 : vector<1x32xi1> to vector<1x32xi1>
    %193 = vector.broadcast %192 : vector<1x32xi1> to vector<8x32xi1>
    %194 = vector.broadcast %cst_49 : f32 to vector<8x32xf32>
    %195 = arith.select %193, %189, %194 : vector<8x32xi1>, vector<8x32xf32>
    %196 = vector.extract_strided_slice %54 {offsets = [0, 21], sizes = [8, 32], strides = [1, 1]} : vector<8x54xf32> to vector<8x32xf32>
    %c5_i32_50 = arith.constant 5 : i32
    %197 = vector.broadcast %c5_i32_50 : i32 to vector<1x32xi32>
    %198 = arith.cmpi sle, %1, %197 : vector<1x32xi32>
    %cst_51 = arith.constant 0.000000e+00 : f32
    %199 = vector.shape_cast %198 : vector<1x32xi1> to vector<1x32xi1>
    %200 = vector.broadcast %199 : vector<1x32xi1> to vector<8x32xi1>
    %201 = vector.broadcast %cst_51 : f32 to vector<8x32xf32>
    %202 = arith.select %200, %196, %201 : vector<8x32xi1>, vector<8x32xf32>
    %203 = vector.extract_strided_slice %54 {offsets = [0, 22], sizes = [8, 32], strides = [1, 1]} : vector<8x54xf32> to vector<8x32xf32>
    %c4_i32_52 = arith.constant 4 : i32
    %204 = vector.broadcast %c4_i32_52 : i32 to vector<1x32xi32>
    %205 = arith.cmpi sle, %1, %204 : vector<1x32xi32>
    %cst_53 = arith.constant 0.000000e+00 : f32
    %206 = vector.shape_cast %205 : vector<1x32xi1> to vector<1x32xi1>
    %207 = vector.broadcast %206 : vector<1x32xi1> to vector<8x32xi1>
    %208 = vector.broadcast %cst_53 : f32 to vector<8x32xf32>
    %209 = arith.select %207, %203, %208 : vector<8x32xi1>, vector<8x32xf32>
    %210 = tpu.concatenate %61, %68, %75, %82, %89, %96, %103, %110, %117, %124, %131, %132, %139, %146, %153, %160 in 0 : vector<8x32xf32>, vector<8x32xf32>, vector<8x32xf32>, vector<8x32xf32>, vector<8x32xf32>, vector<8x32xf32>, vector<8x32xf32>, vector<8x32xf32>, vector<8x32xf32>, vector<8x32xf32>, vector<8x32xf32>, vector<8x32xf32>, vector<8x32xf32>, vector<8x32xf32>, vector<8x32xf32>, vector<8x32xf32> -> vector<128x32xf32>
    %211 = tpu.concatenate %167, %174, %181, %188, %195, %202, %209 in 0 : vector<8x32xf32>, vector<8x32xf32>, vector<8x32xf32>, vector<8x32xf32>, vector<8x32xf32>, vector<8x32xf32>, vector<8x32xf32> -> vector<56x32xf32>
    %212 = tpu.concatenate %210, %211 in 0 : vector<128x32xf32>, vector<56x32xf32> -> vector<184x32xf32>
    %c0_54 = arith.constant 0 : index
    %c0_55 = arith.constant 0 : index
    %213 = vector.load %arg7[%c0_54, %c0_55] : memref<8x184xf32, #tpu.memory_space<vmem>>, vector<8x184xf32>
    %cst_56 = arith.constant dense<0.000000e+00> : vector<8x32xf32>
    %214 = tpu.matmul %213, %212, %cst_56 {dimension_numbers = #tpu.dot_dimension_numbers<[1], [0], [0], [1], [0, 0, 1, 1], [], []>} : vector<8x184xf32>, vector<184x32xf32>, vector<8x32xf32> -> vector<8x32xf32>
    %c0_57 = arith.constant 0 : index
    %c0_58 = arith.constant 0 : index
    %215 = vector.load %arg8[%c0_57, %c0_58] : memref<8x1xf32, #tpu.memory_space<vmem>>, vector<8x1xf32>
    %216 = vector.broadcast %215 : vector<8x1xf32> to vector<8x32xf32>
    %217 = arith.addf %214, %216 : vector<8x32xf32>
    %cst_59 = arith.constant 0.000000e+00 : f32
    %218 = vector.broadcast %cst_59 : f32 to vector<8x32xf32>
    %219 = arith.maximumf %217, %218 : vector<8x32xf32>
    %cst_60 = arith.constant 0.000000e+00 : f32
    %220 = vector.broadcast %cst_60 : f32 to vector<8x1xf32>
    %221 = tpu.concatenate %220, %13, %220 in 1 : vector<8x1xf32>, vector<8x32xf32>, vector<8x1xf32> -> vector<8x34xf32>
    %222 = vector.extract_strided_slice %221 {offsets = [0, 0], sizes = [8, 32], strides = [1, 1]} : vector<8x34xf32> to vector<8x32xf32>
    %223 = vector.extract_strided_slice %221 {offsets = [0, 1], sizes = [8, 32], strides = [1, 1]} : vector<8x34xf32> to vector<8x32xf32>
    %224 = vector.extract_strided_slice %221 {offsets = [0, 2], sizes = [8, 32], strides = [1, 1]} : vector<8x34xf32> to vector<8x32xf32>
    %c1_i32_61 = arith.constant 1 : i32
    %225 = vector.broadcast %c1_i32_61 : i32 to vector<1x32xi32>
    %226 = arith.cmpi sge, %1, %225 : vector<1x32xi32>
    %cst_62 = arith.constant 0.000000e+00 : f32
    %227 = vector.shape_cast %226 : vector<1x32xi1> to vector<1x32xi1>
    %228 = vector.broadcast %227 : vector<1x32xi1> to vector<8x32xi1>
    %229 = vector.broadcast %cst_62 : f32 to vector<8x32xf32>
    %230 = arith.select %228, %222, %229 : vector<8x32xi1>, vector<8x32xf32>
    %c14_i32_63 = arith.constant 14 : i32
    %231 = vector.broadcast %c14_i32_63 : i32 to vector<1x32xi32>
    %232 = arith.cmpi sle, %1, %231 : vector<1x32xi32>
    %cst_64 = arith.constant 0.000000e+00 : f32
    %233 = vector.shape_cast %232 : vector<1x32xi1> to vector<1x32xi1>
    %234 = vector.broadcast %233 : vector<1x32xi1> to vector<8x32xi1>
    %235 = vector.broadcast %cst_64 : f32 to vector<8x32xf32>
    %236 = arith.select %234, %224, %235 : vector<8x32xi1>, vector<8x32xf32>
    %237 = arith.addf %230, %223 : vector<8x32xf32>
    %238 = arith.addf %237, %236 : vector<8x32xf32>
    %cst_65 = arith.constant 0.333333343 : f32
    %239 = vector.broadcast %cst_65 : f32 to vector<8x32xf32>
    %240 = arith.mulf %238, %239 : vector<8x32xf32>
    %c0_66 = arith.constant 0 : index
    %c0_67 = arith.constant 0 : index
    %241 = vector.load %arg9[%c0_66, %c0_67] : memref<8x1xf32, #tpu.memory_space<vmem>>, vector<8x1xf32>
    %242 = vector.broadcast %241 : vector<8x1xf32> to vector<8x32xf32>
    %243 = arith.addf %240, %242 : vector<8x32xf32>
    %cst_68 = arith.constant 0.000000e+00 : f32
    %244 = vector.broadcast %cst_68 : f32 to vector<8x32xf32>
    %245 = arith.maximumf %243, %244 : vector<8x32xf32>
    %c0_69 = arith.constant 0 : index
    %c0_70 = arith.constant 0 : index
    %246 = vector.load %arg10[%c0_69, %c0_70] : memref<32x32xf32, #tpu.memory_space<vmem>>, vector<8x32xf32>
    tpu.vector_store %arg10[%c0_69, %c0_70], %10 {strides = array<i32>} : memref<32x32xf32, #tpu.memory_space<vmem>>, vector<8x32xf32>,
    %c8 = arith.constant 8 : index
    %c0_71 = arith.constant 0 : index
    %247 = vector.load %arg10[%c8, %c0_71] : memref<32x32xf32, #tpu.memory_space<vmem>>, vector<8x32xf32>
    tpu.vector_store %arg10[%c8, %c0_71], %52 {strides = array<i32>} : memref<32x32xf32, #tpu.memory_space<vmem>>, vector<8x32xf32>,
    %c16 = arith.constant 16 : index
    %c0_72 = arith.constant 0 : index
    %248 = vector.load %arg10[%c16, %c0_72] : memref<32x32xf32, #tpu.memory_space<vmem>>, vector<8x32xf32>
    tpu.vector_store %arg10[%c16, %c0_72], %219 {strides = array<i32>} : memref<32x32xf32, #tpu.memory_space<vmem>>, vector<8x32xf32>,
    %c24 = arith.constant 24 : index
    %c0_73 = arith.constant 0 : index
    %249 = vector.load %arg10[%c24, %c0_73] : memref<32x32xf32, #tpu.memory_space<vmem>>, vector<8x32xf32>
    tpu.vector_store %arg10[%c24, %c0_73], %245 {strides = array<i32>} : memref<32x32xf32, #tpu.memory_space<vmem>>, vector<8x32xf32>,
    return
  }
  func.func @transform_0(%arg0: i32) -> (i32, i32) {
    %c0_i32 = arith.constant 0 : i32
    %c0_i32_0 = arith.constant 0 : i32
    return %c0_i32, %arg0 : i32, i32
  }
  func.func @transform_1(%arg0: i32) -> (i32, i32) {
    %c0_i32 = arith.constant 0 : i32
    %c0_i32_0 = arith.constant 0 : i32
    return %c0_i32, %arg0 : i32, i32
  }
  func.func @transform_2(%arg0: i32) -> (i32, i32) {
    %c0_i32 = arith.constant 0 : i32
    %c0_i32_0 = arith.constant 0 : i32
    %c0_i32_1 = arith.constant 0 : i32
    return %c0_i32, %c0_i32_0 : i32, i32
  }
  func.func @transform_3(%arg0: i32) -> (i32, i32) {
    %c0_i32 = arith.constant 0 : i32
    %c0_i32_0 = arith.constant 0 : i32
    %c0_i32_1 = arith.constant 0 : i32
    return %c0_i32, %c0_i32_0 : i32, i32
  }
  func.func @transform_4(%arg0: i32) -> (i32, i32) {
    %c0_i32 = arith.constant 0 : i32
    %c0_i32_0 = arith.constant 0 : i32
    %c0_i32_1 = arith.constant 0 : i32
    return %c0_i32, %c0_i32_0 : i32, i32
  }
  func.func @transform_5(%arg0: i32) -> (i32, i32) {
    %c0_i32 = arith.constant 0 : i32
    %c0_i32_0 = arith.constant 0 : i32
    %c0_i32_1 = arith.constant 0 : i32
    return %c0_i32, %c0_i32_0 : i32, i32
  }
  func.func @transform_6(%arg0: i32) -> (i32, i32) {
    %c0_i32 = arith.constant 0 : i32
    %c0_i32_0 = arith.constant 0 : i32
    %c0_i32_1 = arith.constant 0 : i32
    return %c0_i32, %c0_i32_0 : i32, i32
  }
  func.func @transform_7(%arg0: i32) -> (i32, i32) {
    %c0_i32 = arith.constant 0 : i32
    %c0_i32_0 = arith.constant 0 : i32
    %c0_i32_1 = arith.constant 0 : i32
    return %c0_i32, %c0_i32_0 : i32, i32
  }
  func.func @transform_8(%arg0: i32) -> (i32, i32) {
    %c0_i32 = arith.constant 0 : i32
    %c0_i32_0 = arith.constant 0 : i32
    %c0_i32_1 = arith.constant 0 : i32
    return %c0_i32, %c0_i32_0 : i32, i32
  }
  func.func @transform_9(%arg0: i32) -> (i32, i32) {
    %c0_i32 = arith.constant 0 : i32
    %c0_i32_0 = arith.constant 0 : i32
    return %c0_i32, %arg0 : i32, i32
  }
}

</mosaic_0001>

<llo_original>
// kernel: tpu_custom_call.1
$region0: #{tpu_custom_call.1}
  #allocation0 [shape = 'u32[]', space=smem, size = 0x4, offset = 0x4, fixed_abs, tag = 'smem constant byte address 0x4 - core index']
  #allocation1 [shape = 'u32[144,128]{1,0:T(1,128)}', space=vmem, size = 0x12000, scoped, tag = 'internal scratch']
  %s0 = inlined_call_operand.vmem [shape: f32[4,32], index: 0, kind: input, shape index: {}]
  %s1 = inlined_call_operand.vmem [shape: s32[1,32], index: 1, kind: input, shape index: {}]
  %s2 = inlined_call_operand.vmem [shape: f32[32,4], index: 2, kind: input, shape index: {}]
  %s3 = inlined_call_operand.vmem [shape: f32[32,1], index: 3, kind: input, shape index: {}]
  %s4 = inlined_call_operand.vmem [shape: f32[8,40], index: 4, kind: input, shape index: {}]
  %s5 = inlined_call_operand.vmem [shape: f32[8,1], index: 5, kind: input, shape index: {}]
  %s6 = inlined_call_operand.vmem [shape: f32[8,184], index: 6, kind: input, shape index: {}]
  %s7 = inlined_call_operand.vmem [shape: f32[8,1], index: 7, kind: input, shape index: {}]
  %s8 = inlined_call_operand.vmem [shape: f32[8,1], index: 8, kind: input, shape index: {}]
  %s9 = inlined_call_operand.hbm [shape: f32[32,32], index: 9, kind: output, shape index: {}]
  %s10 = sld [smem:[#allocation0]]
  $region46: #{tpu_custom_call.1} parent=0
    _
  %s12 = ssub.s32 1, %s10
  %s13 = scalar_select 0, %s12, %s10
  $region1: #{tpu_custom_call.1} parent=0
    #allocation2 [shape = 'u8[16384]{0}', space=vmem, size = 0x4000, scoped, tag = 'output window, operand 0, single buffered']
    #allocation3 [shape = 's32[1]{0}', space=sflag, size = 0x4, scoped, tag = 'scoped memory for tpu_custom_call.1']
    %14 = vsyncpa [#allocation3], 0
    // Predicated region
    $region2: #{tpu_custom_call.1} parent=1 // pred_check
      _
    $region3: #{tpu_custom_call.1} parent=1 // pred_check_branch
      %16 = sbr.rel (0) target = $region5
    $region4: #{tpu_custom_call.1} parent=1 // pred_region
      _
    $region5: #{tpu_custom_call.1} parent=1 // pred_fallthru
      _
    // Predicated region
    $region6: #{tpu_custom_call.1} parent=1 // pred_check
      _
    $region7: #{tpu_custom_call.1} parent=1 // pred_check_branch
      %18 = sbr.rel (0) target = $region9
    $region8: #{tpu_custom_call.1} parent=1 // pred_region
      _
    $region9: #{tpu_custom_call.1} parent=1 // pred_fallthru
      _
    // Predicated region
    $region10: #{tpu_custom_call.1} parent=1 // pred_check
      _
    $region11: #{tpu_custom_call.1} parent=1 // pred_check_branch
      %20 = sbr.rel (0) target = $region13
    $region12: #{tpu_custom_call.1} parent=1 // pred_region
      _
    $region13: #{tpu_custom_call.1} parent=1 // pred_fallthru
      _
    // Predicated region
    $region14: #{tpu_custom_call.1} parent=1 // pred_check
      _
    $region15: #{tpu_custom_call.1} parent=1 // pred_check_branch
      %22 = sbr.rel (0) target = $region17
    $region16: #{tpu_custom_call.1} parent=1 // pred_region
      _
    $region17: #{tpu_custom_call.1} parent=1 // pred_fallthru
      _
    // Predicated region
    $region18: #{tpu_custom_call.1} parent=1 // pred_check
      _
    $region19: #{tpu_custom_call.1} parent=1 // pred_check_branch
      %24 = sbr.rel (0) target = $region21
    $region20: #{tpu_custom_call.1} parent=1 // pred_region
      _
    $region21: #{tpu_custom_call.1} parent=1 // pred_fallthru
      _
    // Predicated region
    $region22: #{tpu_custom_call.1} parent=1 // pred_check
      _
    $region23: #{tpu_custom_call.1} parent=1 // pred_check_branch
      %26 = sbr.rel (0) target = $region25
    $region24: #{tpu_custom_call.1} parent=1 // pred_region
      _
    $region25: #{tpu_custom_call.1} parent=1 // pred_fallthru
      _
    // Predicated region
    $region26: #{tpu_custom_call.1} parent=1 // pred_check
      _
    $region27: #{tpu_custom_call.1} parent=1 // pred_check_branch
      %28 = sbr.rel (0) target = $region29
    $region28: #{tpu_custom_call.1} parent=1 // pred_region
      _
    $region29: #{tpu_custom_call.1} parent=1 // pred_fallthru
      _
    // Predicated region
    $region30: #{tpu_custom_call.1} parent=1 // pred_check
      _
    $region31: #{tpu_custom_call.1} parent=1 // pred_check_branch
      %30 = sbr.rel (0) target = $region33
    $region32: #{tpu_custom_call.1} parent=1 // pred_region
      _
    $region33: #{tpu_custom_call.1} parent=1 // pred_fallthru
      _
    // Predicated region
    $region34: #{tpu_custom_call.1} parent=1 // pred_check
      _
    $region35: #{tpu_custom_call.1} parent=1 // pred_check_branch
      %32 = sbr.rel (0) target = $region37
    $region36: #{tpu_custom_call.1} parent=1 // pred_region
      _
    $region37: #{tpu_custom_call.1} parent=1 // pred_fallthru
      _
    %v33 = vld [vmem:[%s0] sm:$0xf]
    %v34 = vld [vmem:[%s1] sm:$0x1]
    %v35 = vld [vmem:[%s2] sm:$0xff]
    %v36 = vld [vmem:[%s2 + $0x8] sm:$0xff]
    %v37 = vld [vmem:[%s2 + $0x10] sm:$0xff]
    %v38 = vld [vmem:[%s2 + $0x18] sm:$0xff]
    %v39 = vld [vmem:[%s3] sm:$0xff]
    %v40 = vld [vmem:[%s3 + $0x8] sm:$0xff]
    %v41 = vld [vmem:[%s3 + $0x10] sm:$0xff]
    %v42 = vld [vmem:[%s3 + $0x18] sm:$0xff]
    %44 = vset.pattern.permute.xlu0 0
    %45 = vperm.xlu0 %44, %v39
    %v46 = vpop.permute.xlu0 %45
    %49 = vset.pattern.permute.xlu0 0
    %50 = vperm.xlu0 %49, %v40
    %v51 = vpop.permute.xlu0 %50
    %54 = vset.pattern.permute.xlu0 0
    %55 = vperm.xlu0 %54, %v41
    %v56 = vpop.permute.xlu0 %55
    %59 = vset.pattern.permute.xlu0 0
    %60 = vperm.xlu0 %59, %v42
    %v61 = vpop.permute.xlu0 %60
    %vm63 = vcmask 31744
    %v65 = vsel %vm63, %v35, 0
    %v68 = vsel %vm63, %v36, 0
    %v71 = vsel %vm63, %v37, 0
    %v74 = vsel %vm63, %v38, 0
    %vm76 = vcmask 1043456
    %v78 = vsel %vm76, %v33, 0
    %80 = vmatprep.subr.mxu0 0.0
    %81 = vmatpush1.msra.mxu0 0.0
    %82 = vmatprep.subr.mxu0 0.0
    %83 = vmatpush1.msra.mxu0 0.0
    %84 = vmatprep.subr.mxu0 0.0
    %85 = vmatpush1.msra.mxu0 0.0
    %86 = vmatprep.subr.mxu0 0.0
    %87 = vmatpush1.msra.mxu0 0.0
    %88 = vmatprep.subr.mxu0 0.0
    %89 = vmatpush1.msra.mxu0 0.0
    %90 = vmatprep.subr.mxu0 0.0
    %91 = vmatpush1.msra.mxu0 0.0
    %92 = vmatprep.subr.mxu0 0.0
    %93 = vmatpush1.msra.mxu0 0.0
    %94 = vmatprep.subr.mxu0 0.0
    %95 = vmatpush1.msra.mxu0 0.0
    %96 = vmatprep.subr.mxu0 0.0
    %97 = vmatpush1.msra.mxu0 0.0
    %98 = vmatprep.subr.mxu0 0.0
    %99 = vmatpush1.msra.mxu0 0.0
    %100 = vmatprep.subr.mxu0 0.0
    %101 = vmatpush1.msra.mxu0 0.0
    %102 = vmatprep.subr.mxu0 0.0
    %103 = vmatpush1.msra.mxu0 0.0
    %104 = vmatprep.subr.mxu0 0.0
    %105 = vmatpush1.msra.mxu0 0.0
    %106 = vmatprep.subr.mxu0 0.0
    %107 = vmatpush1.msra.mxu0 0.0
    %108 = vmatprep.subr.mxu0 0.0
    %109 = vmatpush1.msra.mxu0 0.0
    %110 = vmatprep.subr.mxu0 0.0
    %111 = vmatpush1.msra.mxu0 %v78
    %112 = vmatprep.subr.mxu0 0.0
    %113 = vmatpush2.msra.mxu0 0.0
    %114 = vmatprep.subr.mxu0 0.0
    %115 = vmatpush2.msra.mxu0 0.0
    %116 = vmatprep.subr.mxu0 0.0
    %117 = vmatpush2.msra.mxu0 0.0
    %118 = vmatprep.subr.mxu0 0.0
    %119 = vmatpush2.msra.mxu0 0.0
    %120 = vmatprep.subr.mxu0 0.0
    %121 = vmatpush2.msra.mxu0 0.0
    %122 = vmatprep.subr.mxu0 0.0
    %123 = vmatpush2.msra.mxu0 0.0
    %124 = vmatprep.subr.mxu0 0.0
    %125 = vmatpush2.msra.mxu0 0.0
    %126 = vmatprep.subr.mxu0 0.0
    %127 = vmatpush2.msra.mxu0 0.0
    %128 = vmatprep.subr.mxu0 0.0
    %129 = vmatpush2.msra.mxu0 0.0
    %130 = vmatprep.subr.mxu0 0.0
    %131 = vmatpush2.msra.mxu0 0.0
    %132 = vmatprep.subr.mxu0 0.0
    %133 = vmatpush2.msra.mxu0 0.0
    %134 = vmatprep.subr.mxu0 0.0
    %135 = vmatpush2.msra.mxu0 0.0
    %136 = vmatprep.subr.mxu0 0.0
    %137 = vmatpush2.msra.mxu0 0.0
    %138 = vmatprep.subr.mxu0 0.0
    %139 = vmatpush2.msra.mxu0 0.0
    %140 = vmatprep.subr.mxu0 0.0
    %141 = vmatpush2.msra.mxu0 0.0
    %142 = vmatprep.subr.mxu0 0.0
    %143 = vmatpush2.msra.mxu0 0.0
    %144 = vmatprep.mubr.f32.mxu0 0.0
    %145 = vmatmul.mubr.f32.gmra.mxu0 %v65
    %v146 = vpop.f32.mrf.mxu0
    %v147 = vadd.f32 %v46, %v146
    %v148 = vpop.f32.mrf.mxu0
    %149 = vmatprep.mubr.f32.mxu0 0.0
    %150 = vmatmul.mubr.f32.gmra.mxu0 %v68
    %v151 = vpop.f32.mrf.mxu0
    %v152 = vadd.f32 %v51, %v151
    %v153 = vpop.f32.mrf.mxu0
    %154 = vmatprep.mubr.f32.mxu0 0.0
    %155 = vmatmul.mubr.f32.gmra.mxu0 %v71
    %v156 = vpop.f32.mrf.mxu0
    %v157 = vadd.f32 %v56, %v156
    %v158 = vpop.f32.mrf.mxu0
    %159 = vmatprep.mubr.f32.mxu0 0.0
    %160 = vmatmul.mubr.f32.gmra.mxu0 %v74
    %v161 = vpop.f32.mrf.mxu0
    %v162 = vadd.f32 %v61, %v161
    %v163 = vpop.f32.mrf.mxu0
    %164 = vdwg.mxu0
    %v165 = vmax.f32 %v147, 0.0
    %v166 = vmax.f32 %v152, 0.0
    %v167 = vmax.f32 %v157, 0.0
    %169 = vrot.lane.b32.xlu0 %v166, 2
    %v170 = vpop.permute.xlu0 %169
    %vm172 = vcmask 15360
    %v173 = vsel %vm172, 0.0, %v170
    %vm174 = vcmask 277504
    %v175 = vsel %vm174, %v173, 0.0
    %vm176 = vcmp.ge.s32.totalorder %v34, 2
    %v177 = vsel %vm176, 1, 0
    %v178 = vlaneseq
    %v179 = vshrl.u32 %v178, 7
    %v180 = vsub.s32 0, %v179
    %v181 = vrot.slane %v177, %v180
    %vm182 = vcmp.eq.s32.totalorder %v181, 1
    %v183 = vsel %vm182, %v175, 0.0
    %vm184 = vcmp.ge.s32.totalorder %v34, 1
    %v185 = vsel %vm184, 1, 0
    %v186 = vlaneseq
    %v187 = vshrl.u32 %v186, 7
    %v188 = vsub.s32 0, %v187
    %v189 = vrot.slane %v185, %v188
    %vm190 = vcmp.eq.s32.totalorder %v189, 1
    %192 = vrot.lane.b32.xlu0 %v175, 127
    %v193 = vpop.permute.xlu0 %192
    %v195 = vsel %vm190, %v193, 0.0
    %vm196 = vcmp.le.s32.totalorder %v34, 14
    %v197 = vsel %vm196, 1, 0
    %v198 = vlaneseq
    %v199 = vshrl.u32 %v198, 7
    %v200 = vsub.s32 0, %v199
    %v201 = vrot.slane %v197, %v200
    %vm202 = vcmp.eq.s32.totalorder %v201, 1
    %203 = vrot.lane.b32.xlu0 %v175, 125
    %v204 = vpop.permute.xlu0 %203
    %v206 = vsel %vm202, %v204, 0.0
    %vm207 = vcmp.le.s32.totalorder %v34, 13
    %v208 = vsel %vm207, 1, 0
    %v209 = vlaneseq
    %v210 = vshrl.u32 %v209, 7
    %v211 = vsub.s32 0, %v210
    %v212 = vrot.slane %v208, %v211
    %vm213 = vcmp.eq.s32.totalorder %v212, 1
    %214 = vrot.lane.b32.xlu0 %v175, 124
    %v215 = vpop.permute.xlu0 %214
    %v217 = vsel %vm213, %v215, 0.0
    %218 = vrot.lane.b32.xlu0 %v175, 126
    %v219 = vpop.permute.xlu0 %218
    %v221 = vld [vmem:[%s4] sm:$0xff]
    %v222 = vld [vmem:[%s5] sm:$0xff]
    %224 = vset.pattern.permute.xlu0 0
    %225 = vperm.xlu0 %224, %v222
    %v226 = vpop.permute.xlu0 %225
    %vm228 = vcmask 326656
    %v230 = vsel %vm228, %v221, 0
    %232 = vmatprep.subr.mxu0 0.0
    %233 = vmatpush1.msra.mxu0 0.0
    %234 = vmatprep.subr.mxu0 0.0
    %235 = vmatpush1.msra.mxu0 0.0
    %236 = vmatprep.subr.mxu0 0.0
    %237 = vmatpush1.msra.mxu0 0.0
    %238 = vmatprep.subr.mxu0 0.0
    %239 = vmatpush1.msra.mxu0 0.0
    %240 = vmatprep.subr.mxu0 0.0
    %241 = vmatpush1.msra.mxu0 0.0
    %242 = vmatprep.subr.mxu0 0.0
    %243 = vmatpush1.msra.mxu0 0.0
    %244 = vmatprep.subr.mxu0 0.0
    %245 = vmatpush1.msra.mxu0 0.0
    %246 = vmatprep.subr.mxu0 0.0
    %247 = vmatpush1.msra.mxu0 0.0
    %248 = vmatprep.subr.mxu0 0.0
    %249 = vmatpush1.msra.mxu0 0.0
    %250 = vmatprep.subr.mxu0 0.0
    %251 = vmatpush1.msra.mxu0 0.0
    %252 = vmatprep.subr.mxu0 0.0
    %253 = vmatpush1.msra.mxu0 0.0
    %254 = vmatprep.subr.mxu0 0.0
    %255 = vmatpush1.msra.mxu0 %v217
    %256 = vmatprep.subr.mxu0 0.0
    %257 = vmatpush1.msra.mxu0 %v206
    %258 = vmatprep.subr.mxu0 0.0
    %259 = vmatpush1.msra.mxu0 %v219
    %260 = vmatprep.subr.mxu0 0.0
    %261 = vmatpush1.msra.mxu0 %v195
    %262 = vmatprep.subr.mxu0 0.0
    %263 = vmatpush1.msra.mxu0 %v183
    %264 = vmatprep.subr.mxu0 0.0
    %265 = vmatpush2.msra.mxu0 0.0
    %266 = vmatprep.subr.mxu0 0.0
    %267 = vmatpush2.msra.mxu0 0.0
    %268 = vmatprep.subr.mxu0 0.0
    %269 = vmatpush2.msra.mxu0 0.0
    %270 = vmatprep.subr.mxu0 0.0
    %271 = vmatpush2.msra.mxu0 0.0
    %272 = vmatprep.subr.mxu0 0.0
    %273 = vmatpush2.msra.mxu0 0.0
    %274 = vmatprep.subr.mxu0 0.0
    %275 = vmatpush2.msra.mxu0 0.0
    %276 = vmatprep.subr.mxu0 0.0
    %277 = vmatpush2.msra.mxu0 0.0
    %278 = vmatprep.subr.mxu0 0.0
    %279 = vmatpush2.msra.mxu0 0.0
    %280 = vmatprep.subr.mxu0 0.0
    %281 = vmatpush2.msra.mxu0 0.0
    %282 = vmatprep.subr.mxu0 0.0
    %283 = vmatpush2.msra.mxu0 0.0
    %284 = vmatprep.subr.mxu0 0.0
    %285 = vmatpush2.msra.mxu0 0.0
    %286 = vmatprep.subr.mxu0 0.0
    %287 = vmatpush2.msra.mxu0 0.0
    %288 = vmatprep.subr.mxu0 0.0
    %289 = vmatpush2.msra.mxu0 0.0
    %290 = vmatprep.subr.mxu0 0.0
    %291 = vmatpush2.msra.mxu0 0.0
    %292 = vmatprep.subr.mxu0 0.0
    %293 = vmatpush2.msra.mxu0 0.0
    %294 = vmatprep.subr.mxu0 0.0
    %295 = vmatpush2.msra.mxu0 0.0
    %296 = vmatprep.mubr.f32.mxu0 0.0
    %297 = vmatmul.mubr.f32.gmra.mxu0 %v230
    %v298 = vpop.f32.mrf.mxu0
    %v299 = vadd.f32 %v226, %v298
    %v300 = vpop.f32.mrf.mxu0
    %301 = vdwg.mxu0
    %v302 = vmax.f32 %v299, 0.0
    %304 = vrot.lane.b32.xlu0 %v167, 11
    %v305 = vpop.permute.xlu0 %304
    %vm307 = vcmask 89088
    %v308 = vsel %vm307, 0.0, %v305
    %vm309 = vcmask 351232
    %v310 = vsel %vm309, %v308, 0.0
    %vm311 = vcmp.ge.s32.totalorder %v34, 11
    %v312 = vsel %vm311, 1, 0
    %v313 = vlaneseq
    %v314 = vshrl.u32 %v313, 7
    %v315 = vsub.s32 0, %v314
    %v316 = vrot.slane %v312, %v315
    %vm317 = vcmp.eq.s32.totalorder %v316, 1
    %v318 = vsel %vm317, %v310, 0.0
    %vm319 = vcmp.ge.s32.totalorder %v34, 10
    %v320 = vsel %vm319, 1, 0
    %v321 = vlaneseq
    %v322 = vshrl.u32 %v321, 7
    %v323 = vsub.s32 0, %v322
    %v324 = vrot.slane %v320, %v323
    %vm325 = vcmp.eq.s32.totalorder %v324, 1
    %327 = vrot.lane.b32.xlu0 %v310, 127
    %v328 = vpop.permute.xlu0 %327
    %v330 = vsel %vm325, %v328, 0.0
    %vm331 = vcmp.ge.s32.totalorder %v34, 9
    %v332 = vsel %vm331, 1, 0
    %v333 = vlaneseq
    %v334 = vshrl.u32 %v333, 7
    %v335 = vsub.s32 0, %v334
    %v336 = vrot.slane %v332, %v335
    %vm337 = vcmp.eq.s32.totalorder %v336, 1
    %338 = vrot.lane.b32.xlu0 %v310, 126
    %v339 = vpop.permute.xlu0 %338
    %v341 = vsel %vm337, %v339, 0.0
    %vm342 = vcmp.ge.s32.totalorder %v34, 8
    %v343 = vsel %vm342, 1, 0
    %v344 = vlaneseq
    %v345 = vshrl.u32 %v344, 7
    %v346 = vsub.s32 0, %v345
    %v347 = vrot.slane %v343, %v346
    %vm348 = vcmp.eq.s32.totalorder %v347, 1
    %349 = vrot.lane.b32.xlu0 %v310, 125
    %v350 = vpop.permute.xlu0 %349
    %v352 = vsel %vm348, %v350, 0.0
    %vm353 = vcmp.ge.s32.totalorder %v34, 7
    %v354 = vsel %vm353, 1, 0
    %v355 = vlaneseq
    %v356 = vshrl.u32 %v355, 7
    %v357 = vsub.s32 0, %v356
    %v358 = vrot.slane %v354, %v357
    %vm359 = vcmp.eq.s32.totalorder %v358, 1
    %360 = vrot.lane.b32.xlu0 %v310, 124
    %v361 = vpop.permute.xlu0 %360
    %v363 = vsel %vm359, %v361, 0.0
    %vm364 = vcmp.ge.s32.totalorder %v34, 6
    %v365 = vsel %vm364, 1, 0
    %v366 = vlaneseq
    %v367 = vshrl.u32 %v366, 7
    %v368 = vsub.s32 0, %v367
    %v369 = vrot.slane %v365, %v368
    %vm370 = vcmp.eq.s32.totalorder %v369, 1
    %371 = vrot.lane.b32.xlu0 %v310, 123
    %v372 = vpop.permute.xlu0 %371
    %v374 = vsel %vm370, %v372, 0.0
    %vm375 = vcmp.ge.s32.totalorder %v34, 5
    %v376 = vsel %vm375, 1, 0
    %v377 = vlaneseq
    %v378 = vshrl.u32 %v377, 7
    %v379 = vsub.s32 0, %v378
    %v380 = vrot.slane %v376, %v379
    %vm381 = vcmp.eq.s32.totalorder %v380, 1
    %382 = vrot.lane.b32.xlu0 %v310, 122
    %v383 = vpop.permute.xlu0 %382
    %v385 = vsel %vm381, %v383, 0.0
    %vm386 = vcmp.ge.s32.totalorder %v34, 4
    %v387 = vsel %vm386, 1, 0
    %v388 = vlaneseq
    %v389 = vshrl.u32 %v388, 7
    %v390 = vsub.s32 0, %v389
    %v391 = vrot.slane %v387, %v390
    %vm392 = vcmp.eq.s32.totalorder %v391, 1
    %393 = vrot.lane.b32.xlu0 %v310, 121
    %v394 = vpop.permute.xlu0 %393
    %v396 = vsel %vm392, %v394, 0.0
    %vm397 = vcmp.ge.s32.totalorder %v34, 3
    %v398 = vsel %vm397, 1, 0
    %v399 = vlaneseq
    %v400 = vshrl.u32 %v399, 7
    %v401 = vsub.s32 0, %v400
    %v402 = vrot.slane %v398, %v401
    %vm403 = vcmp.eq.s32.totalorder %v402, 1
    %404 = vrot.lane.b32.xlu0 %v310, 120
    %v405 = vpop.permute.xlu0 %404
    %v407 = vsel %vm403, %v405, 0.0
    %408 = vrot.lane.b32.xlu0 %v310, 119
    %v409 = vpop.permute.xlu0 %408
    %v411 = vsel %vm182, %v409, 0.0
    %412 = vrot.lane.b32.xlu0 %v310, 118
    %v413 = vpop.permute.xlu0 %412
    %v415 = vsel %vm190, %v413, 0.0
    %416 = vrot.lane.b32.xlu0 %v310, 116
    %v417 = vpop.permute.xlu0 %416
    %v419 = vsel %vm202, %v417, 0.0
    %420 = vrot.lane.b32.xlu0 %v310, 115
    %v421 = vpop.permute.xlu0 %420
    %v423 = vsel %vm213, %v421, 0.0
    %vm424 = vcmp.le.s32.totalorder %v34, 12
    %v425 = vsel %vm424, 1, 0
    %v426 = vlaneseq
    %v427 = vshrl.u32 %v426, 7
    %v428 = vsub.s32 0, %v427
    %v429 = vrot.slane %v425, %v428
    %vm430 = vcmp.eq.s32.totalorder %v429, 1
    %431 = vrot.lane.b32.xlu0 %v310, 114
    %v432 = vpop.permute.xlu0 %431
    %v434 = vsel %vm430, %v432, 0.0
    %vm435 = vcmp.le.s32.totalorder %v34, 11
    %v436 = vsel %vm435, 1, 0
    %v437 = vlaneseq
    %v438 = vshrl.u32 %v437, 7
    %v439 = vsub.s32 0, %v438
    %v440 = vrot.slane %v436, %v439
    %vm441 = vcmp.eq.s32.totalorder %v440, 1
    %442 = vrot.lane.b32.xlu0 %v310, 113
    %v443 = vpop.permute.xlu0 %442
    %v445 = vsel %vm441, %v443, 0.0
    %vm446 = vcmp.le.s32.totalorder %v34, 10
    %v447 = vsel %vm446, 1, 0
    %v448 = vlaneseq
    %v449 = vshrl.u32 %v448, 7
    %v450 = vsub.s32 0, %v449
    %v451 = vrot.slane %v447, %v450
    %vm452 = vcmp.eq.s32.totalorder %v451, 1
    %453 = vrot.lane.b32.xlu0 %v310, 112
    %v454 = vpop.permute.xlu0 %453
    %v456 = vsel %vm452, %v454, 0.0
    %vm457 = vcmp.le.s32.totalorder %v34, 9
    %v458 = vsel %vm457, 1, 0
    %v459 = vlaneseq
    %v460 = vshrl.u32 %v459, 7
    %v461 = vsub.s32 0, %v460
    %v462 = vrot.slane %v458, %v461
    %vm463 = vcmp.eq.s32.totalorder %v462, 1
    %464 = vrot.lane.b32.xlu0 %v310, 111
    %v465 = vpop.permute.xlu0 %464
    %v467 = vsel %vm463, %v465, 0.0
    %vm468 = vcmp.le.s32.totalorder %v34, 8
    %v469 = vsel %vm468, 1, 0
    %v470 = vlaneseq
    %v471 = vshrl.u32 %v470, 7
    %v472 = vsub.s32 0, %v471
    %v473 = vrot.slane %v469, %v472
    %vm474 = vcmp.eq.s32.totalorder %v473, 1
    %475 = vrot.lane.b32.xlu0 %v310, 110
    %v476 = vpop.permute.xlu0 %475
    %v478 = vsel %vm474, %v476, 0.0
    %vm479 = vcmp.le.s32.totalorder %v34, 7
    %v480 = vsel %vm479, 1, 0
    %v481 = vlaneseq
    %v482 = vshrl.u32 %v481, 7
    %v483 = vsub.s32 0, %v482
    %v484 = vrot.slane %v480, %v483
    %vm485 = vcmp.eq.s32.totalorder %v484, 1
    %486 = vrot.lane.b32.xlu0 %v310, 109
    %v487 = vpop.permute.xlu0 %486
    %v489 = vsel %vm485, %v487, 0.0
    %vm490 = vcmp.le.s32.totalorder %v34, 6
    %v491 = vsel %vm490, 1, 0
    %v492 = vlaneseq
    %v493 = vshrl.u32 %v492, 7
    %v494 = vsub.s32 0, %v493
    %v495 = vrot.slane %v491, %v494
    %vm496 = vcmp.eq.s32.totalorder %v495, 1
    %497 = vrot.lane.b32.xlu0 %v310, 108
    %v498 = vpop.permute.xlu0 %497
    %v500 = vsel %vm496, %v498, 0.0
    %vm501 = vcmp.le.s32.totalorder %v34, 5
    %v502 = vsel %vm501, 1, 0
    %v503 = vlaneseq
    %v504 = vshrl.u32 %v503, 7
    %v505 = vsub.s32 0, %v504
    %v506 = vrot.slane %v502, %v505
    %vm507 = vcmp.eq.s32.totalorder %v506, 1
    %508 = vrot.lane.b32.xlu0 %v310, 107
    %v509 = vpop.permute.xlu0 %508
    %v511 = vsel %vm507, %v509, 0.0
    %vm512 = vcmp.le.s32.totalorder %v34, 4
    %v513 = vsel %vm512, 1, 0
    %v514 = vlaneseq
    %v515 = vshrl.u32 %v514, 7
    %v516 = vsub.s32 0, %v515
    %v517 = vrot.slane %v513, %v516
    %vm518 = vcmp.eq.s32.totalorder %v517, 1
    %519 = vrot.lane.b32.xlu0 %v310, 106
    %v520 = vpop.permute.xlu0 %519
    %v522 = vsel %vm518, %v520, 0.0
    %523 = vrot.lane.b32.xlu0 %v310, 117
    %v524 = vpop.permute.xlu0 %523
    %v526 = vld [vmem:[%s6] sm:$0xff]
    %v527 = vld [vmem:[%s6 + $0x8] sm:$0xff]
    %v528 = vld [vmem:[%s7] sm:$0xff]
    %530 = vset.pattern.permute.xlu0 0
    %531 = vperm.xlu0 %530, %v528
    %v532 = vpop.permute.xlu0 %531
    %vm534 = vcmask 457728
    %v536 = vsel %vm534, %v527, 0
    %538 = vmatprep.subr.mxu0 0.0
    %539 = vmatpush1.msra.mxu0 %v445
    %540 = vmatprep.subr.mxu0 0.0
    %541 = vmatpush1.msra.mxu0 %v434
    %542 = vmatprep.subr.mxu0 0.0
    %543 = vmatpush1.msra.mxu0 %v423
    %544 = vmatprep.subr.mxu0 0.0
    %545 = vmatpush1.msra.mxu0 %v419
    %546 = vmatprep.subr.mxu0 0.0
    %547 = vmatpush1.msra.mxu0 %v524
    %548 = vmatprep.subr.mxu0 0.0
    %549 = vmatpush1.msra.mxu0 %v415
    %550 = vmatprep.subr.mxu0 0.0
    %551 = vmatpush1.msra.mxu0 %v411
    %552 = vmatprep.subr.mxu0 0.0
    %553 = vmatpush1.msra.mxu0 %v407
    %554 = vmatprep.subr.mxu0 0.0
    %555 = vmatpush1.msra.mxu0 %v396
    %556 = vmatprep.subr.mxu0 0.0
    %557 = vmatpush1.msra.mxu0 %v385
    %558 = vmatprep.subr.mxu0 0.0
    %559 = vmatpush1.msra.mxu0 %v374
    %560 = vmatprep.subr.mxu0 0.0
    %561 = vmatpush1.msra.mxu0 %v363
    %562 = vmatprep.subr.mxu0 0.0
    %563 = vmatpush1.msra.mxu0 %v352
    %564 = vmatprep.subr.mxu0 0.0
    %565 = vmatpush1.msra.mxu0 %v341
    %566 = vmatprep.subr.mxu0 0.0
    %567 = vmatpush1.msra.mxu0 %v330
    %568 = vmatprep.subr.mxu0 0.0
    %569 = vmatpush1.msra.mxu0 %v318
    %570 = vmatprep.subr.mxu0 0.0
    %571 = vmatpush2.msra.mxu0 0.0
    %572 = vmatprep.subr.mxu0 0.0
    %573 = vmatpush2.msra.mxu0 0.0
    %574 = vmatprep.subr.mxu0 0.0
    %575 = vmatpush2.msra.mxu0 0.0
    %576 = vmatprep.subr.mxu0 0.0
    %577 = vmatpush2.msra.mxu0 0.0
    %578 = vmatprep.subr.mxu0 0.0
    %579 = vmatpush2.msra.mxu0 0.0
    %580 = vmatprep.subr.mxu0 0.0
    %581 = vmatpush2.msra.mxu0 0.0
    %582 = vmatprep.subr.mxu0 0.0
    %583 = vmatpush2.msra.mxu0 0.0
    %584 = vmatprep.subr.mxu0 0.0
    %585 = vmatpush2.msra.mxu0 0.0
    %586 = vmatprep.subr.mxu0 0.0
    %587 = vmatpush2.msra.mxu0 0.0
    %588 = vmatprep.subr.mxu0 0.0
    %589 = vmatpush2.msra.mxu0 %v522
    %590 = vmatprep.subr.mxu0 0.0
    %591 = vmatpush2.msra.mxu0 %v511
    %592 = vmatprep.subr.mxu0 0.0
    %593 = vmatpush2.msra.mxu0 %v500
    %594 = vmatprep.subr.mxu0 0.0
    %595 = vmatpush2.msra.mxu0 %v489
    %596 = vmatprep.subr.mxu0 0.0
    %597 = vmatpush2.msra.mxu0 %v478
    %598 = vmatprep.subr.mxu0 0.0
    %599 = vmatpush2.msra.mxu0 %v467
    %600 = vmatprep.subr.mxu0 0.0
    %601 = vmatpush2.msra.mxu0 %v456
    %602 = vmatprep.mubr.f32.mxu0 %v536
    %603 = vmatmul.mubr.f32.gmra.mxu0 %v526
    %v604 = vpop.f32.mrf.mxu0
    %v605 = vadd.f32 %v532, %v604
    %v606 = vpop.f32.mrf.mxu0
    %607 = vdwg.mxu0
    %v608 = vmax.f32 %v605, 0.0
    %610 = vrot.lane.b32.xlu0 %v162, 1
    %v611 = vpop.permute.xlu0 %610
    %vm613 = vcmask 7168
    %v614 = vsel %vm613, 0.0, %v611
    %vm615 = vcmask 269312
    %v616 = vsel %vm615, %v614, 0.0
    %v617 = vsel %vm190, %v616, 0.0
    %619 = vrot.lane.b32.xlu0 %v616, 126
    %v620 = vpop.permute.xlu0 %619
    %v622 = vsel %vm202, %v620, 0.0
    %623 = vrot.lane.b32.xlu0 %v616, 127
    %v624 = vpop.permute.xlu0 %623
    %v626 = vadd.f32 %v617, %v624
    %v627 = vadd.f32 %v626, %v622
    %v628 = vmul.f32 %v627, 0.33333334
    %v629 = vld [vmem:[%s8] sm:$0xff]
    %631 = vset.pattern.permute.xlu0 0
    %632 = vperm.xlu0 %631, %v629
    %v633 = vpop.permute.xlu0 %632
    %v635 = vadd.f32 %v628, %v633
    %v636 = vmax.f32 %v635, 0.0
    %vm637 = vcmask 261120
    %638 = vst.msk [vmem:[#allocation2] sm:$0xff] %vm637, %v165
    %639 = vst.msk [vmem:[#allocation2 + $0x8] sm:$0xff] %vm637, %v302
    %640 = vst.msk [vmem:[#allocation2 + $0x10] sm:$0xff] %vm637, %v608
    %641 = vst.msk [vmem:[#allocation2 + $0x18] sm:$0xff] %vm637, %v636
    // Predicated region
    $region38: #{tpu_custom_call.1} parent=1 // pred_check
      _
    $region39: #{tpu_custom_call.1} parent=1 // pred_check_branch
      %643 = sbr.rel (0) target = $region41
    $region40: #{tpu_custom_call.1} parent=1 // pred_region
      %s645 = ssub.s32 512, 512
      %646 = vsyncadd [#allocation3], %s645
      %s647 = sshll.u32 [#allocation2], 4
      %s648 = int_to_ptr.vmem [resolvable:$true] %s647
      %653 = dma.vmem_to_hbm [thread:$0]  %s648, 512, %s9, [#allocation3], 128, 128, 8
    $region41: #{tpu_custom_call.1} parent=1 // pred_fallthru
      _
    // Predicated region
    $region42: #{tpu_custom_call.1} parent=1 // pred_check
      _
    $region43: #{tpu_custom_call.1} parent=1 // pred_check_branch
      %655 = sbr.rel (0) target = $region45
    $region44: #{tpu_custom_call.1} parent=1 // pred_region
      %656 = dma.done [#allocation3], 512
    $region45: #{tpu_custom_call.1} parent=1 // pred_fallthru
      _
    %657 = vsyncpa [#allocation3], 1

</llo_original>
